<compile_context>
chip_gen: v5e
topology: v5e:2x2
jax: 0.10.0
libtpu: 0.0.40
codegen_flags: <defaults>
</compile_context>

<pallas_src>
import jax
import jax.numpy as jnp
from jax.experimental import pallas as pl
from jax.experimental.pallas import tpu as pltpu

LHS_LEN = 2          # len(x327) == 2
RHS = (4, 64)        # constant tuple added in forward (baked into the kernel)
OUT_LEN = LHS_LEN + len(RHS)


def _concat_kernel(a_ref, o_ref):
    # a_ref: SMEM int32[LHS_LEN], o_ref: SMEM int32[OUT_LEN]
    # out = a ++ (4, 64); RHS values are compile-time immediates.
    for i in range(LHS_LEN):
        o_ref[i] = a_ref[i]
    for j, v in enumerate(RHS):
        o_ref[LHS_LEN + j] = jnp.int32(v)


# Build the pallas_call callable once at import time (cached; no per-call
# reconstruction overhead).
_concat_pallas = pl.pallas_call(
    _concat_kernel,
    out_shape=jax.ShapeDtypeStruct((OUT_LEN,), jnp.int32),
    in_specs=[pl.BlockSpec(memory_space=pltpu.SMEM)],
    out_specs=pl.BlockSpec(memory_space=pltpu.SMEM),
)


def forward(x327):
    """Mirrors M.forward: x328 = x327 + (4, 64)  (tuple concatenation).

    Pure-Python path: this module is metadata-only, so the optimal
    implementation performs no device work at all.
    """
    return tuple(x327) + RHS


def forward_pallas(x327):
    """Device-side variant kept for the kernel contract.

    Single H2D copy for the lhs tuple, RHS inlined as immediates in the
    kernel, and one bulk D2H readback.
    """
    a = jnp.asarray(x327, dtype=jnp.int32)
    out = _concat_pallas(a)
    out = jax.block_until_ready(out)
    # One bulk transfer instead of per-element int() syncs.
    return tuple(jax.device_get(out).tolist())


if __name__ == "__main__":
    # Deterministic setup (module has no tensor parameters; the input is the
    # fixed shape-tuple from the original trace).
    _ = jax.random.PRNGKey(0)  # unused: no random tensor inputs
    x327 = (1, 384)

    expected = x327 + (4, 64)  # PyTorch reference semantics

    # Fast (recommended) path.
    x328 = forward(x327)
    assert x328 == expected, f"got {x328}, expected {expected}"

    # Kernel path: run once on TPU and verify it matches.
    x328_dev = forward_pallas(x327)
    assert x328_dev == expected, f"got {x328_dev}, expected {expected}"

    print("KERNEL_OK")
</pallas_src>

<mosaic_0001>
module attributes {stable_mosaic.version = 11 : i64} {
  func.func @_concat_kernel(%arg0: memref<2xi32, #tpu.memory_space<smem>>, %arg1: memref<4xi32, #tpu.memory_space<smem>>) attributes {dimension_semantics = [], scalar_prefetch = 0 : i64, scratch_operands = 0 : i64, tpu.core_type = #tpu.core_type<tc>} {
    %c0 = arith.constant 0 : index
    %0 = memref.load %arg0[%c0] : memref<2xi32, #tpu.memory_space<smem>>
    %c0_0 = arith.constant 0 : index
    %1 = memref.load %arg1[%c0_0] : memref<4xi32, #tpu.memory_space<smem>>
    memref.store %0, %arg1[%c0_0] : memref<4xi32, #tpu.memory_space<smem>>
    %c1 = arith.constant 1 : index
    %2 = memref.load %arg0[%c1] : memref<2xi32, #tpu.memory_space<smem>>
    %c1_1 = arith.constant 1 : index
    %3 = memref.load %arg1[%c1_1] : memref<4xi32, #tpu.memory_space<smem>>
    memref.store %2, %arg1[%c1_1] : memref<4xi32, #tpu.memory_space<smem>>
    %c4_i32 = arith.constant 4 : i32
    %c2 = arith.constant 2 : index
    %4 = memref.load %arg1[%c2] : memref<4xi32, #tpu.memory_space<smem>>
    memref.store %c4_i32, %arg1[%c2] : memref<4xi32, #tpu.memory_space<smem>>
    %c64_i32 = arith.constant 64 : i32
    %c3 = arith.constant 3 : index
    %5 = memref.load %arg1[%c3] : memref<4xi32, #tpu.memory_space<smem>>
    memref.store %c64_i32, %arg1[%c3] : memref<4xi32, #tpu.memory_space<smem>>
    return
  }
}

</mosaic_0001>

<llo_original>
// kernel: tpu_custom_call.1
$region0: #{tpu_custom_call.1}
  #allocation0 [shape = 'u32[]', space=smem, size = 0x4, offset = 0x4, fixed_abs, tag = 'smem constant byte address 0x4 - core index']
  #allocation1 [shape = 'u32[72,128]{1,0:T(1,128)}', space=vmem, size = 0x9000, scoped, tag = 'internal scratch']
  %s0 = inlined_call_operand.hbm [shape: s32[2], index: 0, kind: input, shape index: {}]
  %s1 = inlined_call_operand.hbm [shape: s32[4], index: 1, kind: output, shape index: {}]
  %s2 = sld [smem:[#allocation0]]
  $region18: #{tpu_custom_call.1} parent=0
    _
  %s4 = ssub.s32 1, %s2
  %s5 = scalar_select 0, %s4, %s2
  $region1: #{tpu_custom_call.1} parent=0
    #allocation2 [shape = 'u8[512]{0}', space=smem, size = 0x200, scoped, tag = 'input window, operand 0, single buffered']
    #allocation3 [shape = 's32[1]{0}', space=sflag, size = 0x4, scoped, tag = 'scoped memory for tpu_custom_call.1']
    #allocation4 [shape = 's32[1]{0}', space=sflag, size = 0x4, scoped, tag = 'scoped memory for tpu_custom_call.1']
    #allocation5 [shape = 'u8[512]{0}', space=smem, size = 0x200, scoped, tag = 'output window, operand 0, single buffered']
    %6 = vsyncpa [#allocation3], 0
    %7 = vsyncpa [#allocation4], 0
    // Predicated region
    $region2: #{tpu_custom_call.1} parent=1 // pred_check
      _
    $region3: #{tpu_custom_call.1} parent=1 // pred_check_branch
      %9 = sbr.rel (0) target = $region5
    $region4: #{tpu_custom_call.1} parent=1 // pred_region
      %11 = vsyncadd [#allocation3], 0
      %s13 = sshll.u32 %s0, 4
      %s14 = int_to_ptr.hbm [resolvable:$true] %s13
      %16 = dma.hbm_to_smem %s14, 16, [#allocation2], [#allocation3]
    $region5: #{tpu_custom_call.1} parent=1 // pred_fallthru
      _
    // Predicated region
    $region6: #{tpu_custom_call.1} parent=1 // pred_check
      _
    $region7: #{tpu_custom_call.1} parent=1 // pred_check_branch
      %18 = sbr.rel (0) target = $region9
    $region8: #{tpu_custom_call.1} parent=1 // pred_region
      %20 = dma.done [#allocation3], 16
    $region9: #{tpu_custom_call.1} parent=1 // pred_fallthru
      _
    %21 = sfence
    %s22 = sld [smem:[#allocation2]]
    %s23 = scalar_lea.smem [#allocation5], 0
    %24 = sst [smem:[%s23]] %s22
    %s25 = sld [smem:[#allocation2 + $0x1]]
    %s26 = scalar_lea.smem [#allocation5], 1
    %27 = sst [smem:[%s26]] %s25
    %s28 = scalar_lea.smem [#allocation5], 2
    %29 = sst [smem:[%s28]] 4
    %s30 = scalar_lea.smem [#allocation5], 3
    %31 = sst [smem:[%s30]] 64
    // Predicated region
    $region10: #{tpu_custom_call.1} parent=1 // pred_check
      _
    $region11: #{tpu_custom_call.1} parent=1 // pred_check_branch
      %33 = sbr.rel (0) target = $region13
    $region12: #{tpu_custom_call.1} parent=1 // pred_region
      %35 = vsyncadd [#allocation4], 0
      %s37 = sshll.u32 %s1, 4
      %s38 = int_to_ptr.hbm [resolvable:$true] %s37
      %40 = dma.smem_to_hbm [#allocation5], 16, %s38, [#allocation4]
    $region13: #{tpu_custom_call.1} parent=1 // pred_fallthru
      _
    // Predicated region
    $region14: #{tpu_custom_call.1} parent=1 // pred_check
      _
    $region15: #{tpu_custom_call.1} parent=1 // pred_check_branch
      %42 = sbr.rel (0) target = $region17
    $region16: #{tpu_custom_call.1} parent=1 // pred_region
      %44 = dma.done [#allocation4], 16
    $region17: #{tpu_custom_call.1} parent=1 // pred_fallthru
      _
    %45 = sfence
    %46 = vsyncpa [#allocation3], 1
    %47 = vsyncpa [#allocation4], 1

</llo_original>
